<compile_context>
chip_gen: v7x
topology: tpu7x:2x2x1
jax: 0.10.0
libtpu: 0.0.40
codegen_flags: <defaults>
</compile_context>

<pallas_src>
import functools

import jax
import jax.numpy as jnp
from jax import lax
from jax.experimental import pallas as pl
from jax.experimental.pallas import tpu as pltpu


_VMEM_BUDGET = 40 << 20      # per-step working-set budget (fits v7x's 64 MiB)


def _pick_tile(dim, candidates):
    """Largest candidate tile that divides dim, else the full dim."""
    for c in candidates:
        if dim % c == 0:
            return c
    return dim


def _vmem_limit(estimate):
    # Generous headroom for Mosaic-internal scratch, capped below/at v7x's
    # physical VMEM so a v6e-tuned tiling can't silently OOM on v7x.
    return int(min(max(2 * estimate, 32 << 20), 64 << 20))


# ----------------------------------------------------------------------------
# Tiled linear projection:  y = x @ W_t + b   (W_t stored (in, out))
# ----------------------------------------------------------------------------
def _linear_kernel(x_ref, w_ref, b_ref, o_ref, acc_ref):
    @pl.when(pl.program_id(2) == 0)
    def _init():
        acc_ref[...] = jnp.zeros_like(acc_ref)

    acc_ref[...] += jnp.dot(x_ref[...], w_ref[...],
                            preferred_element_type=jnp.float32)

    @pl.when(pl.program_id(2) == pl.num_programs(2) - 1)
    def _finalize():
        o_ref[...] = (acc_ref[...] + b_ref[...]).astype(o_ref.dtype)


def linear_t(x2d, w_t, b):
    """y = x2d @ w_t + b with w_t already laid out (Hin, Hout)."""
    M, Hin = x2d.shape
    Hout = w_t.shape[1]
    isz = x2d.dtype.itemsize

    # tm is a second-minor block dim -> multiple of 8; tn/tk are minor block
    # dims -> multiples of 128 (or the full extent for small shapes).
    tm = _pick_tile(M, (1024, 512, 256, 128, 64, 32, 16, 8))
    tn = _pick_tile(Hout, (512, 256, 128))
    tk = _pick_tile(Hin, (512, 256, 128))

    def est(tm_):
        return (2 * (tm_ * tk + tk * tn + tn) * isz   # double-buffered inputs
                + tm_ * tn * 4                        # f32 accumulator
                + 2 * tm_ * tn * isz)                 # double-buffered output

    while est(tm) > _VMEM_BUDGET and tm % 16 == 0:
        tm //= 2

    grid = (M // tm, Hout // tn, Hin // tk)
    return pl.pallas_call(
        _linear_kernel,
        out_shape=jax.ShapeDtypeStruct((M, Hout), x2d.dtype),
        grid=grid,
        in_specs=[
            pl.BlockSpec((tm, tk), lambda i, j, k: (i, k)),
            pl.BlockSpec((tk, tn), lambda i, j, k: (k, j)),
            pl.BlockSpec((1, tn), lambda i, j, k: (0, j)),
        ],
        out_specs=pl.BlockSpec((tm, tn), lambda i, j, k: (i, j)),
        scratch_shapes=[pltpu.VMEM((tm, tn), jnp.float32)],
        compiler_params=pltpu.CompilerParams(
            dimension_semantics=("parallel", "parallel", "arbitrary"),
            vmem_limit_bytes=_vmem_limit(est(tm))),
    )(x2d, w_t, b.reshape(1, Hout))


def linear(x2d, w, b):
    # w in PyTorch (out, in) layout; one-time wrapper-side transpose.
    return linear_t(x2d, w.T, b)


# ----------------------------------------------------------------------------
# Attention core: one (batch, head-group, q-tile) per grid step.
#   scores = (Q*scale) K^T;  weights = softmax(scores + bias);  ctx = weights V
# ----------------------------------------------------------------------------
def _attention_kernel(*refs, heads_per_group, head_dim, has_mask, scale):
    q_ref, k_ref, v_ref = refs[0], refs[1], refs[2]
    o_ref = refs[3 + has_mask]
    w_ref = refs[4 + has_mask]

    if has_mask:
        # Additive bias computed ONCE per grid step, reused by every head
        # (mask arrives as int8; no per-head compare/select, no f32 mask DMA).
        bias = jnp.where(refs[3][0] == 0, jnp.float32(-1e30), jnp.float32(0.0))

    for h in range(heads_per_group):          # small static unroll (1-2 typical)
        lo = h * head_dim
        hi = lo + head_dim
        # Fold 1/sqrt(Dh) into Q (tq*Dh multiplies instead of tq*Skv).
        q_h = q_ref[0, :, lo:hi] * scale      # (tq, Dh)
        k_h = k_ref[0, :, lo:hi]              # (Skv, Dh)
        v_h = v_ref[0, :, lo:hi]              # (Skv, Dh)

        # Q_h K_h^T via transposed contraction (no materialized transpose).
        scores = lax.dot_general(
            q_h, k_h, dimension_numbers=(((1,), (1,)), ((), ())),
            preferred_element_type=jnp.float32)          # (tq, Skv)
        if has_mask:
            scores = scores + bias

        m = jnp.max(scores, axis=-1, keepdims=True)
        e = jnp.exp(scores - m)
        denom = jnp.sum(e, axis=-1, keepdims=True)
        # Exact reciprocal: attn is an exported output checked at 1e-4.
        attn = e * pl.reciprocal(denom, approx=False)

        ctx = jnp.dot(attn.astype(v_h.dtype), v_h,
                      preferred_element_type=jnp.float32)

        # Per-head stores: no concat, no head tiles kept live across the loop.
        w_ref[0, h, :, :] = attn.astype(w_ref.dtype)
        o_ref[0, :, lo:hi] = ctx.astype(o_ref.dtype)


def attention_core(q_or_qkv, k, v, num_heads, mask=None):
    """q_or_qkv: (B,Sq,H) with separate k/v, or fused (B,Sq,3H) with k=v=None."""
    fused = k is None
    B, Sq, W = q_or_qkv.shape
    H = W // 3 if fused else W
    Dh = H // num_heads
    scale = 1.0 / (Dh ** 0.5)
    has_mask = mask is not None
    Skv = Sq if fused else k.shape[1]

    # Head group: smallest lane-aligned (multiple-of-128) group of heads; fall
    # back to all heads (full-H lane block) when H itself is small/unaligned.
    gh = num_heads
    for cand in range(1, num_heads + 1):
        if num_heads % cand == 0 and (cand * Dh) % 128 == 0:
            gh = cand
            break
    gw = gh * Dh
    n_groups = num_heads // gh

    if fused and gw % 128 != 0:
        # Lane blocks inside the packed (B,S,3H) array would not be
        # 128-aligned; split once in HBM and use the generic path.
        k = q_or_qkv[..., H:2 * H]
        v = q_or_qkv[..., 2 * H:]
        q_or_qkv = q_or_qkv[..., :H]
        fused = False

    # q tile along the sequence; shrink until the per-step working set fits.
    tq = _pick_tile(Sq, (512, 256, 128, 64, 32, 16, 8))
    isz = q_or_qkv.dtype.itemsize

    def est(tq_):
        per_step = (tq_ * gw * isz                    # q block
                    + 2 * Skv * gw * isz              # k, v blocks
                    + (tq_ * Skv if has_mask else 0)  # int8 mask block
                    + tq_ * gw * isz                  # ctx out block
                    + gh * tq_ * Skv * 4)             # f32 attn out block
        return 2 * per_step                            # double-buffered

    while est(tq) > _VMEM_BUDGET and tq % 16 == 0:
        tq //= 2

    grid = (B, n_groups, Sq // tq)

    if fused:
        inputs = [q_or_qkv, q_or_qkv, q_or_qkv]
        k_off, v_off = H // gw, 2 * H // gw
    else:
        inputs = [q_or_qkv, k, v]
        k_off = v_off = 0

    in_specs = [
        pl.BlockSpec((1, tq, gw), lambda b, g, qi: (b, qi, g)),
        pl.BlockSpec((1, Skv, gw), lambda b, g, qi, o=k_off: (b, 0, g + o)),
        pl.BlockSpec((1, Skv, gw), lambda b, g, qi, o=v_off: (b, 0, g + o)),
    ]
    if has_mask:
        inputs.append((mask != 0).astype(jnp.int8))
        in_specs.append(pl.BlockSpec((1, tq, Skv), lambda b, g, qi: (b, qi, 0)))

    kernel = functools.partial(
        _attention_kernel, heads_per_group=gh, head_dim=Dh,
        has_mask=has_mask, scale=scale)

    # NOTE: attn weights are exported in f32 (spec output, checked at 1e-4);
    # a bf16 export would halve the writeback on v5e if the consumer allows it.
    ctx, attn = pl.pallas_call(
        kernel,
        grid=grid,
        out_shape=(jax.ShapeDtypeStruct((B, Sq, H), q_or_qkv.dtype),
                   jax.ShapeDtypeStruct((B, num_heads, Sq, Skv), jnp.float32)),
        in_specs=in_specs,
        out_specs=(
            pl.BlockSpec((1, tq, gw), lambda b, g, qi: (b, qi, g)),
            pl.BlockSpec((1, gh, tq, Skv), lambda b, g, qi: (b, g, qi, 0)),
        ),
        compiler_params=pltpu.CompilerParams(
            dimension_semantics=("parallel", "parallel", "parallel"),
            vmem_limit_bytes=_vmem_limit(est(tq))),
    )(*inputs)
    return ctx, attn


# ----------------------------------------------------------------------------
# Full module forward
# ----------------------------------------------------------------------------
def prepare_params(params):
    """One-time prep: fuse QKV weights and pre-transpose weights to (in, out)
    so the per-forward path does no weight concat/transpose."""
    p = dict(params)
    p["wqkv_t"] = jnp.concatenate(
        [params["wq"], params["wk"], params["wv"]], axis=0).T     # (H, 3H)
    p["bqkv"] = jnp.concatenate(
        [params["bq"], params["bk"], params["bv"]], axis=0)       # (3H,)
    for name in ("wq", "wk", "wv", "wo"):
        p[name + "_t"] = params[name].T
    return p


def multi_head_attention(query, key, value, params, num_heads, mask=None):
    B, S, H = query.shape

    def wt(name):
        return params.get(name + "_t", params[name].T)

    # NOTE: the fused self-attention fast path is dispatched on Python object
    # identity; under jit with distinct-but-equal tracers it falls back to the
    # numerically identical 3-projection path (perf trap only, not a bug).
    if (query is key) and (query is value):
        w_qkv_t = params.get("wqkv_t")
        if w_qkv_t is None:
            w_qkv_t = jnp.concatenate(
                [params["wq"], params["wk"], params["wv"]], axis=0).T
            b_qkv = jnp.concatenate(
                [params["bq"], params["bk"], params["bv"]], axis=0)
        else:
            b_qkv = params["bqkv"]
        qkv = linear_t(query.reshape(B * S, H), w_qkv_t, b_qkv).reshape(B, S, 3 * H)
        ctx, attn_weights = attention_core(qkv, None, None, num_heads, mask=mask)
    else:
        Q = linear_t(query.reshape(B * S, H), wt("wq"), params["bq"]).reshape(B, S, H)
        K = linear_t(key.reshape(-1, H), wt("wk"), params["bk"]).reshape(key.shape)
        V = linear_t(value.reshape(-1, H), wt("wv"), params["bv"]).reshape(value.shape)
        ctx, attn_weights = attention_core(Q, K, V, num_heads, mask=mask)

    # ctx already comes out in (B, S, H) layout -> no head-merge transpose.
    out = linear_t(ctx.reshape(B * S, H), wt("wo"), params["bo"]).reshape(B, S, H)
    return out, attn_weights


# ----------------------------------------------------------------------------
# Deterministic parameter init (nn.Linear-style shapes)
# ----------------------------------------------------------------------------
def init_params(hidden_dim, key):
    keys = jax.random.split(key, 8)
    bound = 1.0 / (hidden_dim ** 0.5)

    def w(k):
        return jax.random.uniform(k, (hidden_dim, hidden_dim), jnp.float32,
                                  minval=-bound, maxval=bound)

    def b(k):
        return jax.random.uniform(k, (hidden_dim,), jnp.float32,
                                  minval=-bound, maxval=bound)

    return {
        "wq": w(keys[0]), "bq": b(keys[1]),
        "wk": w(keys[2]), "bk": b(keys[3]),
        "wv": w(keys[4]), "bv": b(keys[5]),
        "wo": w(keys[6]), "bo": b(keys[7]),
    }


# ----------------------------------------------------------------------------
# Pure-JAX reference for verification
# ----------------------------------------------------------------------------
def reference_mha(query, key, value, params, num_heads, mask=None):
    B, S, H = query.shape
    Dh = H // num_heads
    Q = query @ params["wq"].T + params["bq"]
    K = key @ params["wk"].T + params["bk"]
    V = value @ params["wv"].T + params["bv"]
    Q = Q.reshape(B, S, num_heads, Dh).transpose(0, 2, 1, 3)
    K = K.reshape(B, S, num_heads, Dh).transpose(0, 2, 1, 3)
    V = V.reshape(B, S, num_heads, Dh).transpose(0, 2, 1, 3)
    scores = jnp.einsum("bhqd,bhkd->bhqk", Q, K) / (Dh ** 0.5)
    if mask is not None:
        scores = jnp.where(mask[:, None, :, :] == 0, -1e30, scores)
    attn = jax.nn.softmax(scores, axis=-1)
    out = jnp.einsum("bhqk,bhkd->bhqd", attn, V)
    out = out.transpose(0, 2, 1, 3).reshape(B, S, H)
    out = out @ params["wo"].T + params["bo"]
    return out, attn


if __name__ == "__main__":
    batch, seq, hidden, num_heads = 2, 8, 32, 4

    key = jax.random.PRNGKey(0)
    kq, kk, kv, kx, kp = jax.random.split(key, 5)
    q_in = jax.random.normal(kq, (batch, seq, hidden), jnp.float32)
    k_in = jax.random.normal(kk, (batch, seq, hidden), jnp.float32)
    v_in = jax.random.normal(kv, (batch, seq, hidden), jnp.float32)
    x_in = jax.random.normal(kx, (batch, seq, hidden), jnp.float32)
    params = prepare_params(init_params(hidden, kp))

    def check(got, want, name):
        assert got.shape == want.shape, (name, got.shape, want.shape)
        assert jnp.allclose(got, want, atol=1e-4, rtol=1e-4), name

    # 1) Cross-attention (separate Q/K/V inputs), no mask.
    out, attn = multi_head_attention(q_in, k_in, v_in, params, num_heads)
    jax.block_until_ready((out, attn))
    ref_out, ref_attn = reference_mha(q_in, k_in, v_in, params, num_heads)
    assert out.shape == (batch, seq, hidden)
    assert attn.shape == (batch, num_heads, seq, seq)
    check(out, ref_out, "out")
    check(attn, ref_attn, "attn")

    # 2) Self-attention: exercises the fused-QKV projection path.
    out_s, attn_s = multi_head_attention(x_in, x_in, x_in, params, num_heads)
    jax.block_until_ready((out_s, attn_s))
    ref_out_s, ref_attn_s = reference_mha(x_in, x_in, x_in, params, num_heads)
    check(out_s, ref_out_s, "self_out")
    check(attn_s, ref_attn_s, "self_attn")

    # 3) Optional mask (causal) on the general path.
    causal = jnp.broadcast_to(
        jnp.tril(jnp.ones((seq, seq), jnp.int32)), (batch, seq, seq))
    out_m, attn_m = multi_head_attention(q_in, k_in, v_in, params, num_heads,
                                         mask=causal)
    jax.block_until_ready((out_m, attn_m))
    ref_out_m, ref_attn_m = reference_mha(q_in, k_in, v_in, params, num_heads,
                                          mask=causal)
    check(out_m, ref_out_m, "masked_out")
    check(attn_m, ref_attn_m, "masked_attn")

    print("KERNEL_OK")
</pallas_src>

<mosaic_0001>
module attributes {stable_mosaic.version = 11 : i64} {
  func.func @_linear_kernel(%arg0: i32, %arg1: i32, %arg2: i32, %arg3: memref<16x32xf32, #tpu.memory_space<vmem>>, %arg4: memref<32x32xf32, #tpu.memory_space<vmem>>, %arg5: memref<1x32xf32, #tpu.memory_space<vmem>>, %arg6: memref<16x32xf32, #tpu.memory_space<vmem>>, %arg7: memref<16x32xf32, #tpu.memory_space<vmem>>) attributes {dimension_semantics = [#tpu.dimension_semantics<parallel>, #tpu.dimension_semantics<parallel>, #tpu.dimension_semantics<arbitrary>], iteration_bounds = array<i64: 1, 1, 1>, scalar_prefetch = 0 : i64, scratch_operands = 1 : i64, tpu.core_type = #tpu.core_type<tc>, window_params = [{transform_indices = @transform_0, window_bounds = array<i64: 16, 32>}, {transform_indices = @transform_1, window_bounds = array<i64: 32, 32>}, {transform_indices = @transform_2, window_bounds = array<i64: 1, 32>}, {transform_indices = @transform_3, window_bounds = array<i64: 16, 32>}]} {
    %c0_i32 = arith.constant 0 : i32
    %0 = arith.cmpi eq, %arg2, %c0_i32 : i32
    %1 = arith.extui %0 : i1 to i32
    %c0_i32_0 = arith.constant 0 : i32
    %2 = arith.cmpi ne, %1, %c0_i32_0 : i32
    scf.if %2 {
      %cst_10 = arith.constant 0.000000e+00 : f32
      %12 = vector.broadcast %cst_10 : f32 to vector<16x32xf32>
      %c0_11 = arith.constant 0 : index
      %c0_12 = arith.constant 0 : index
      %13 = vector.load %arg7[%c0_11, %c0_12] : memref<16x32xf32, #tpu.memory_space<vmem>>, vector<16x32xf32>
      tpu.vector_store %arg7[%c0_11, %c0_12], %12 {strides = array<i32>} : memref<16x32xf32, #tpu.memory_space<vmem>>, vector<16x32xf32>,
    } else {
    }
    %c0 = arith.constant 0 : index
    %c0_1 = arith.constant 0 : index
    %3 = vector.load %arg7[%c0, %c0_1] : memref<16x32xf32, #tpu.memory_space<vmem>>, vector<16x32xf32>
    %c0_2 = arith.constant 0 : index
    %c0_3 = arith.constant 0 : index
    %4 = vector.load %arg3[%c0_2, %c0_3] : memref<16x32xf32, #tpu.memory_space<vmem>>, vector<16x32xf32>
    %c0_4 = arith.constant 0 : index
    %c0_5 = arith.constant 0 : index
    %5 = vector.load %arg4[%c0_4, %c0_5] : memref<32x32xf32, #tpu.memory_space<vmem>>, vector<32x32xf32>
    %cst = arith.constant dense<0.000000e+00> : vector<16x32xf32>
    %6 = tpu.matmul %4, %5, %cst {dimension_numbers = #tpu.dot_dimension_numbers<[1], [0], [0], [1], [0, 0, 1, 1], [], []>} : vector<16x32xf32>, vector<32x32xf32>, vector<16x32xf32> -> vector<16x32xf32>
    %7 = arith.addf %3, %6 : vector<16x32xf32>
    %c0_6 = arith.constant 0 : index
    %c0_7 = arith.constant 0 : index
    %8 = vector.load %arg7[%c0_6, %c0_7] : memref<16x32xf32, #tpu.memory_space<vmem>>, vector<16x32xf32>
    tpu.vector_store %arg7[%c0_6, %c0_7], %7 {strides = array<i32>} : memref<16x32xf32, #tpu.memory_space<vmem>>, vector<16x32xf32>,
    %c0_i32_8 = arith.constant 0 : i32
    %9 = arith.cmpi eq, %arg2, %c0_i32_8 : i32
    %10 = arith.extui %9 : i1 to i32
    %c0_i32_9 = arith.constant 0 : i32
    %11 = arith.cmpi ne, %10, %c0_i32_9 : i32
    scf.if %11 {
      %c0_10 = arith.constant 0 : index
      %c0_11 = arith.constant 0 : index
      %12 = vector.load %arg7[%c0_10, %c0_11] : memref<16x32xf32, #tpu.memory_space<vmem>>, vector<16x32xf32>
      %c0_12 = arith.constant 0 : index
      %c0_13 = arith.constant 0 : index
      %13 = vector.load %arg5[%c0_12, %c0_13] : memref<1x32xf32, #tpu.memory_space<vmem>>, vector<1x32xf32>
      %14 = vector.broadcast %13 : vector<1x32xf32> to vector<16x32xf32>
      %15 = arith.addf %12, %14 : vector<16x32xf32>
      %c0_14 = arith.constant 0 : index
      %c0_15 = arith.constant 0 : index
      %16 = vector.load %arg6[%c0_14, %c0_15] : memref<16x32xf32, #tpu.memory_space<vmem>>, vector<16x32xf32>
      tpu.vector_store %arg6[%c0_14, %c0_15], %15 {strides = array<i32>} : memref<16x32xf32, #tpu.memory_space<vmem>>, vector<16x32xf32>,
    } else {
    }
    return
  }
  func.func @transform_0(%arg0: i32, %arg1: i32, %arg2: i32) -> (i32, i32) {
    %c0_i32 = arith.constant 0 : i32
    return %arg0, %arg2 : i32, i32
  }
  func.func @transform_1(%arg0: i32, %arg1: i32, %arg2: i32) -> (i32, i32) {
    %c0_i32 = arith.constant 0 : i32
    return %arg2, %arg1 : i32, i32
  }
  func.func @transform_2(%arg0: i32, %arg1: i32, %arg2: i32) -> (i32, i32) {
    %c0_i32 = arith.constant 0 : i32
    %c0_i32_0 = arith.constant 0 : i32
    return %c0_i32, %arg1 : i32, i32
  }
  func.func @transform_3(%arg0: i32, %arg1: i32, %arg2: i32) -> (i32, i32) {
    %c0_i32 = arith.constant 0 : i32
    return %arg0, %arg1 : i32, i32
  }
}

</mosaic_0001>

<llo_original>
// kernel: tpu_custom_call.1
$region0: #{tpu_custom_call.1}
  #allocation0 [shape = 'u32[]', space=smem, size = 0x4, offset = 0x4, fixed_abs, tag = 'smem constant byte address 0x4 - core index']
  #allocation1 [shape = 'u32[144,128]{1,0:T(1,128)}', space=vmem, size = 0x12000, scoped, tag = 'internal scratch']
  #allocation2 [shape = 'f32[16,32]{1,0:T(8,128)}', space=vmem, size = 0x2000, scoped, tag = 'scratch operand']
  %s0 = inlined_call_operand.hbm [shape: f32[16,32], index: 0, kind: input, shape index: {}]
  %s1 = inlined_call_operand.hbm [shape: f32[32,32], index: 1, kind: input, shape index: {}]
  %s2 = inlined_call_operand.vmem [shape: f32[1,32], index: 2, kind: input, shape index: {}]
  %s3 = inlined_call_operand.hbm [shape: f32[16,32], index: 3, kind: output, shape index: {}]
  %s4 = sld [smem:[#allocation0]]
  $region38: #{tpu_custom_call.1} parent=0
    _
  %s6 = ssub.s32 1, %s4
  %s7 = scalar_select 0, %s6, %s4
  $region1: #{tpu_custom_call.1} parent=0
    #allocation3 [shape = 'u8[8192]{0}', space=vmem, size = 0x2000, scoped, tag = 'input window, operand 0, single buffered']
    #allocation4 [shape = 's32[1]{0}', space=sflag, size = 0x4, scoped, tag = 'scoped memory for tpu_custom_call.1']
    #allocation5 [shape = 's32[1]{0}', space=sflag, size = 0x4, scoped, tag = 'scoped memory for tpu_custom_call.1']
    #allocation6 [shape = 'u8[16384]{0}', space=vmem, size = 0x4000, scoped, tag = 'input window, operand 1, single buffered']
    #allocation7 [shape = 's32[1]{0}', space=sflag, size = 0x4, scoped, tag = 'scoped memory for tpu_custom_call.1']
    #allocation8 [shape = 'u8[8192]{0}', space=vmem, size = 0x2000, scoped, tag = 'output window, operand 0, single buffered']
    %8 = vsyncpa [#allocation4], 0
    %9 = vsyncpa [#allocation7], 0
    %10 = vsyncpa [#allocation5], 0
    // Predicated region
    $region2: #{tpu_custom_call.1} parent=1 // pred_check
      _
    $region3: #{tpu_custom_call.1} parent=1 // pred_check_branch
      %12 = sbr.rel (0) target = $region5
    $region4: #{tpu_custom_call.1} parent=1 // pred_region
      %s14 = ssub.s32 256, 256
      %15 = vsyncadd [#allocation4], %s14
      %s16 = sshll.u32 [#allocation3], 4
      %s17 = int_to_ptr.vmem [resolvable:$true] %s16
      %22 = dma.hbm_to_vmem [thread:$0]  %s0, 256, %s17, [#allocation4], 128, 128, 8
    $region5: #{tpu_custom_call.1} parent=1 // pred_fallthru
      _
    // Predicated region
    $region6: #{tpu_custom_call.1} parent=1 // pred_check
      _
    $region7: #{tpu_custom_call.1} parent=1 // pred_check_branch
      %24 = sbr.rel (0) target = $region9
    $region8: #{tpu_custom_call.1} parent=1 // pred_region
      %s26 = ssub.s32 512, 512
      %27 = vsyncadd [#allocation7], %s26
      %s28 = sshll.u32 [#allocation6], 4
      %s29 = int_to_ptr.vmem [resolvable:$true] %s28
      %34 = dma.hbm_to_vmem [thread:$0]  %s1, 512, %s29, [#allocation7], 128, 128, 8
    $region9: #{tpu_custom_call.1} parent=1 // pred_fallthru
      _
    // Predicated region
    $region10: #{tpu_custom_call.1} parent=1 // pred_check
      _
    $region11: #{tpu_custom_call.1} parent=1 // pred_check_branch
      %36 = sbr.rel (0) target = $region13
    $region12: #{tpu_custom_call.1} parent=1 // pred_region
      _
    $region13: #{tpu_custom_call.1} parent=1 // pred_fallthru
      _
    // Predicated region
    $region14: #{tpu_custom_call.1} parent=1 // pred_check
      _
    $region15: #{tpu_custom_call.1} parent=1 // pred_check_branch
      %38 = sbr.rel (0) target = $region17
    $region16: #{tpu_custom_call.1} parent=1 // pred_region
      %39 = dma.done [#allocation4], 256
    $region17: #{tpu_custom_call.1} parent=1 // pred_fallthru
      _
    // Predicated region
    $region18: #{tpu_custom_call.1} parent=1 // pred_check
      _
    $region19: #{tpu_custom_call.1} parent=1 // pred_check_branch
      %41 = sbr.rel (0) target = $region21
    $region20: #{tpu_custom_call.1} parent=1 // pred_region
      %42 = dma.done [#allocation7], 512
    $region21: #{tpu_custom_call.1} parent=1 // pred_fallthru
      _
    %p43 = scmp.eq.s32.totalorder 0, 0
    // Predicated region
    $region22: #{tpu_custom_call.1} parent=1 // pred_check
      %p44 = pneg %p43
    $region23: #{tpu_custom_call.1} parent=1 // pred_check_branch
      %46 = sbr.rel (%p44) target = $region25
    $region24: #{tpu_custom_call.1} parent=1 // pred_region
      %vm47 = vcmask 261120
      %48 = vst.msk [vmem:[#allocation2] sm:$0xff] %vm47, 0.0
      %49 = vst.msk [vmem:[#allocation2 + $0x8] sm:$0xff] %vm47, 0.0
    $region25: #{tpu_custom_call.1} parent=1 // pred_fallthru
      _
    %v50 = vld [vmem:[#allocation2] sm:$0xff]
    %v51 = vld [vmem:[#allocation2 + $0x8] sm:$0xff]
    %v52 = vld [vmem:[#allocation3] sm:$0xff]
    %v53 = vld [vmem:[#allocation3 + $0x8] sm:$0xff]
    %v54 = vld [vmem:[#allocation6] sm:$0xff]
    %v55 = vld [vmem:[#allocation6 + $0x8] sm:$0xff]
    %v56 = vld [vmem:[#allocation6 + $0x10] sm:$0xff]
    %v57 = vld [vmem:[#allocation6 + $0x18] sm:$0xff]
    %vm58 = vcmask 261120
    %v60 = vsel %vm58, %v52, 0
    %v63 = vsel %vm58, %v53, 0
    %65 = vmatprep.subr.mxu0 0.0
    %66 = vmatpush1.msra.mxu0 %v54
    %67 = vmatprep.subr.mxu0 0.0
    %68 = vmatpush1.msra.mxu0 %v55
    %69 = vmatprep.subr.mxu0 0.0
    %70 = vmatpush1.msra.mxu0 %v56
    %71 = vmatprep.subr.mxu0 0.0
    %72 = vmatpush1.msra.mxu0 %v57
    %73 = vmatprep.subr.mxu0 0.0
    %74 = vmatpush1.msra.mxu0 0.0
    %75 = vmatprep.subr.mxu0 0.0
    %76 = vmatpush1.msra.mxu0 0.0
    %77 = vmatprep.subr.mxu0 0.0
    %78 = vmatpush1.msra.mxu0 0.0
    %79 = vmatprep.subr.mxu0 0.0
    %80 = vmatpush1.msra.mxu0 0.0
    %81 = vmatprep.subr.mxu0 0.0
    %82 = vmatpush1.msra.mxu0 0.0
    %83 = vmatprep.subr.mxu0 0.0
    %84 = vmatpush1.msra.mxu0 0.0
    %85 = vmatprep.subr.mxu0 0.0
    %86 = vmatpush1.msra.mxu0 0.0
    %87 = vmatprep.subr.mxu0 0.0
    %88 = vmatpush1.msra.mxu0 0.0
    %89 = vmatprep.subr.mxu0 0.0
    %90 = vmatpush1.msra.mxu0 0.0
    %91 = vmatprep.subr.mxu0 0.0
    %92 = vmatpush1.msra.mxu0 0.0
    %93 = vmatprep.subr.mxu0 0.0
    %94 = vmatpush1.msra.mxu0 0.0
    %95 = vmatprep.subr.mxu0 0.0
    %96 = vmatpush1.msra.mxu0 0.0
    %97 = vmatprep.subr.mxu0 0.0
    %98 = vmatpush1.msra.mxu0 0.0
    %99 = vmatprep.subr.mxu0 0.0
    %100 = vmatpush1.msra.mxu0 0.0
    %101 = vmatprep.subr.mxu0 0.0
    %102 = vmatpush1.msra.mxu0 0.0
    %103 = vmatprep.subr.mxu0 0.0
    %104 = vmatpush1.msra.mxu0 0.0
    %105 = vmatprep.subr.mxu0 0.0
    %106 = vmatpush1.msra.mxu0 0.0
    %107 = vmatprep.subr.mxu0 0.0
    %108 = vmatpush1.msra.mxu0 0.0
    %109 = vmatprep.subr.mxu0 0.0
    %110 = vmatpush1.msra.mxu0 0.0
    %111 = vmatprep.subr.mxu0 0.0
    %112 = vmatpush1.msra.mxu0 0.0
    %113 = vmatprep.subr.mxu0 0.0
    %114 = vmatpush1.msra.mxu0 0.0
    %115 = vmatprep.subr.mxu0 0.0
    %116 = vmatpush1.msra.mxu0 0.0
    %117 = vmatprep.subr.mxu0 0.0
    %118 = vmatpush1.msra.mxu0 0.0
    %119 = vmatprep.subr.mxu0 0.0
    %120 = vmatpush1.msra.mxu0 0.0
    %121 = vmatprep.subr.mxu0 0.0
    %122 = vmatpush1.msra.mxu0 0.0
    %123 = vmatprep.subr.mxu0 0.0
    %124 = vmatpush1.msra.mxu0 0.0
    %125 = vmatprep.subr.mxu0 0.0
    %126 = vmatpush1.msra.mxu0 0.0
    %127 = vmatprep.subr.mxu0 0.0
    %128 = vmatpush1.msra.mxu0 0.0
    %129 = vmatprep.mubr.f32.mxu0 0.0
    %130 = vmatmul.mubr.f32.gmra.mrb[0].mxu0 %v60
    %v131 = vpop.f32.mrb[0].mxu0
    %v132 = vadd.f32 0.0, %v131
    %v133 = vpop.f32.mrb[0].mxu0
    %134 = vmatprep.mubr.f32.mxu0 0.0
    %135 = vmatmul.mubr.f32.gmra.mrb[0].mxu0 %v63
    %v136 = vpop.f32.mrb[0].mxu0
    %v137 = vadd.f32 0.0, %v136
    %v138 = vpop.f32.mrb[0].mxu0
    %139 = vdwg.mxu0
    %v140 = vadd.f32 %v50, %v132
    %v141 = vadd.f32 %v51, %v137
    %142 = vst.msk [vmem:[#allocation2] sm:$0xff] %vm58, %v140
    %143 = vst.msk [vmem:[#allocation2 + $0x8] sm:$0xff] %vm58, %v141
    // Predicated region
    $region26: #{tpu_custom_call.1} parent=1 // pred_check
      %p144 = pneg %p43
    $region27: #{tpu_custom_call.1} parent=1 // pred_check_branch
      %146 = sbr.rel (%p144) target = $region29
    $region28: #{tpu_custom_call.1} parent=1 // pred_region
      %v147 = vld [vmem:[#allocation2] sm:$0xff]
      %v148 = vld [vmem:[#allocation2 + $0x8] sm:$0xff]
      %v149 = vld [vmem:[%s2] sm:$0x1]
      %v151 = vlaneseq
      %v152 = vshrl.u32 %v151, 7
      %v153 = vsub.s32 0, %v152
      %v154 = vrot.slane %v149, %v153
      %v156 = vadd.f32 %v147, %v154
      %v157 = vadd.f32 %v148, %v154
      %158 = vst.msk [vmem:[#allocation8] sm:$0xff] %vm58, %v156
      %159 = vst.msk [vmem:[#allocation8 + $0x8] sm:$0xff] %vm58, %v157
    $region29: #{tpu_custom_call.1} parent=1 // pred_fallthru
      _
    // Predicated region
    $region30: #{tpu_custom_call.1} parent=1 // pred_check
      _
    $region31: #{tpu_custom_call.1} parent=1 // pred_check_branch
      %161 = sbr.rel (0) target = $region33
    $region32: #{tpu_custom_call.1} parent=1 // pred_region
      %s163 = ssub.s32 256, 256
      %164 = vsyncadd [#allocation5], %s163
      %s165 = sshll.u32 [#allocation8], 4
      %s166 = int_to_ptr.vmem [resolvable:$true] %s165
      %171 = dma.vmem_to_hbm [thread:$0]  %s166, 256, %s3, [#allocation5], 128, 128, 8
    $region33: #{tpu_custom_call.1} parent=1 // pred_fallthru
      _
    // Predicated region
    $region34: #{tpu_custom_call.1} parent=1 // pred_check
      _
    $region35: #{tpu_custom_call.1} parent=1 // pred_check_branch
      %173 = sbr.rel (0) target = $region37
    $region36: #{tpu_custom_call.1} parent=1 // pred_region
      %174 = dma.done [#allocation5], 256
    $region37: #{tpu_custom_call.1} parent=1 // pred_fallthru
      _
    %175 = vsyncpa [#allocation4], 1
    %176 = vsyncpa [#allocation7], 1
    %177 = vsyncpa [#allocation5], 1

</llo_original>
